<compile_context>
chip_gen: v5e
topology: v5e:2x2
jax: 0.10.0
libtpu: 0.0.40
codegen_flags: <defaults>
</compile_context>

<pallas_src>
import functools

import jax
import jax.numpy as jnp
from jax import lax
from jax.experimental import pallas as pl
from jax.experimental.pallas import tpu as pltpu

TEMPERATURE = 0.07
BASE_TEMPERATURE = 0.07


def _supcon_kernel(anchor_ref, contrast_ref, row_lab_ref, col_lab_ref, out_ref,
                   *, tile_n, inv_temp, loss_scale):
    a = anchor_ref[...].astype(jnp.float32)        # (T, D) anchor tile
    c = contrast_ref[...].astype(jnp.float32)      # (N, D) full contrast block
    T = a.shape[0]
    N = c.shape[0]

    # anchor . contrast^T / temperature  -> MXU, f32 accumulate
    s = lax.dot_general(a, c, (((1,), (1,)), ((), ())),
                        preferred_element_type=jnp.float32) * inv_temp   # (T, N)

    # row max over ALL columns (incl. self) — matches torch.max(dim=1)
    row_max = jnp.max(s, axis=-1, keepdims=True)
    logits = s - row_max                                                 # (T, N)

    # masks built in-kernel: self-exclusion via iota, positives via labels
    i = pl.program_id(0)
    row_ids = lax.broadcasted_iota(jnp.int32, (T, N), 0) + i * tile_n
    col_ids = lax.broadcasted_iota(jnp.int32, (T, N), 1)
    not_self = (row_ids != col_ids).astype(jnp.float32)                  # (T, N)
    pos_mask = (row_lab_ref[...] == col_lab_ref[...]).astype(jnp.float32) * not_self

    # log-sum-exp over non-self columns
    exp_logits = jnp.exp(logits) * not_self
    log_denom = jnp.log(jnp.sum(exp_logits, axis=-1, keepdims=True))     # (T, 1)

    # sum over positives without materializing log_prob = logits - log_denom
    pos_count = jnp.sum(pos_mask, axis=-1, keepdims=True)                # (T, 1)
    pos_logit_sum = jnp.sum(pos_mask * logits, axis=-1, keepdims=True)   # (T, 1)
    safe_count = jnp.where(pos_count < 1e-6, 1.0, pos_count)
    mean_log_prob_pos = (pos_logit_sum - pos_count * log_denom) / safe_count

    out_ref[...] = (-loss_scale) * mean_log_prob_pos                     # (T, 1)


def _pick_tile(n, cap=512):
    """Largest multiple-of-8 divisor of n that is <= cap; fall back to n."""
    best = None
    for t in range(8, min(n, cap) + 1, 8):
        if n % t == 0:
            best = t
    return best if best is not None else n


def supcon_loss(features, labels=None, mask=None, *,
                temperature=TEMPERATURE, base_temperature=BASE_TEMPERATURE,
                contrast_mode="all", tile_n=None):
    """features: [bsz, n_views, ...]; labels: [bsz] ints (None -> SimCLR)."""
    if features.ndim < 3:
        raise ValueError("`features` needs to be [bsz, n_views, ...]")
    bsz, n_views = features.shape[0], features.shape[1]
    feats = features.reshape(bsz, n_views, -1)
    dim = feats.shape[-1]

    if labels is not None and mask is not None:
        raise ValueError("Cannot define both `labels` and `mask`")
    if mask is not None:
        # TODO(synk): arbitrary (possibly asymmetric) user-supplied masks are not
        # expressible via the per-row label-equality compare used in the kernel.
        raise NotImplementedError("explicit `mask` not supported by the Pallas kernel")
    if contrast_mode != "all":
        # TODO(synk): contrast_mode='one' (anchors = view 0 only) not implemented.
        raise NotImplementedError("only contrast_mode='all' is implemented")

    if labels is None:
        base_labels = jnp.arange(bsz, dtype=jnp.int32)   # eye-mask == unique labels
    else:
        base_labels = labels.reshape(-1).astype(jnp.int32)
        if base_labels.shape[0] != bsz:
            raise ValueError("Num of labels does not match num of features")

    # contrast_feature = torch.cat(torch.unbind(features, dim=1), dim=0)
    contrast = jnp.transpose(feats, (1, 0, 2)).reshape(n_views * bsz, dim)
    n_total = n_views * bsz
    row_labels = jnp.tile(base_labels, (n_views,))       # label of each contrast row

    t_n = tile_n if tile_n is not None else _pick_tile(n_total)
    if n_total % t_n != 0:
        raise ValueError(f"tile_n={t_n} must divide N={n_total}")
    num_tiles = n_total // t_n

    kernel = functools.partial(
        _supcon_kernel,
        tile_n=t_n,
        inv_temp=float(1.0 / temperature),
        loss_scale=float(temperature / base_temperature),
    )

    feat_bytes = int(contrast.size) * int(contrast.dtype.itemsize)
    cost = pl.CostEstimate(
        flops=2 * n_total * n_total * dim + 10 * n_total * n_total,
        transcendentals=n_total * n_total + 2 * n_total,
        bytes_accessed=feat_bytes * 2 + n_total * 4 * 3,
    )

    per_row = pl.pallas_call(
        kernel,
        out_shape=jax.ShapeDtypeStruct((n_total, 1), jnp.float32),
        grid=(num_tiles,),
        in_specs=[
            pl.BlockSpec((t_n, dim), lambda i: (i, 0)),        # anchor tile
            pl.BlockSpec((n_total, dim), lambda i: (0, 0)),    # full contrast (resident)
            pl.BlockSpec((t_n, 1), lambda i: (i, 0)),          # row labels (tile)
            pl.BlockSpec((1, n_total), lambda i: (0, 0)),      # column labels (resident)
        ],
        out_specs=pl.BlockSpec((t_n, 1), lambda i: (i, 0)),
        compiler_params=pltpu.CompilerParams(
            dimension_semantics=("parallel",),
            vmem_limit_bytes=32 * 1024 * 1024,
        ),
        cost_estimate=cost,
    )(contrast, contrast,
      row_labels.reshape(n_total, 1),
      row_labels.reshape(1, n_total))

    # loss.view(anchor_count, batch_size).mean() == mean over all anchor rows
    return jnp.mean(per_row)


def supcon_loss_ref(features, labels=None, mask=None,
                    temperature=TEMPERATURE, base_temperature=BASE_TEMPERATURE):
    """Pure-JAX mirror of the PyTorch module (contrast_mode='all')."""
    bsz, n_views = features.shape[0], features.shape[1]
    feats = features.reshape(bsz, n_views, -1).astype(jnp.float32)
    if labels is None and mask is None:
        mask = jnp.eye(bsz, dtype=jnp.float32)
    elif labels is not None:
        lab = labels.reshape(-1, 1)
        mask = (lab == lab.T).astype(jnp.float32)
    else:
        mask = mask.astype(jnp.float32)
    contrast_feature = jnp.concatenate([feats[:, v] for v in range(n_views)], axis=0)
    anchor_feature = contrast_feature
    anchor_count = n_views
    adc = jnp.matmul(anchor_feature, contrast_feature.T,
                     precision=lax.Precision.HIGHEST) / temperature
    logits = adc - jnp.max(adc, axis=1, keepdims=True)
    mask_full = jnp.tile(mask, (anchor_count, n_views))
    n = anchor_count * bsz
    logits_mask = 1.0 - jnp.eye(n, dtype=jnp.float32)
    mask_full = mask_full * logits_mask
    exp_logits = jnp.exp(logits) * logits_mask
    log_prob = logits - jnp.log(jnp.sum(exp_logits, axis=1, keepdims=True))
    mask_pos_pairs = jnp.sum(mask_full, axis=1)
    mask_pos_pairs = jnp.where(mask_pos_pairs < 1e-6, 1.0, mask_pos_pairs)
    mean_log_prob_pos = jnp.sum(mask_full * log_prob, axis=1) / mask_pos_pairs
    loss = -(temperature / base_temperature) * mean_log_prob_pos
    return jnp.mean(loss.reshape(anchor_count, bsz))


if __name__ == "__main__":
    key = jax.random.PRNGKey(0)
    k1, k2 = jax.random.split(key)
    bsz, n_views, dim = 8, 2, 32
    feats = jax.random.normal(k1, (bsz, n_views, dim), dtype=jnp.float32)
    feats = feats / jnp.linalg.norm(feats, axis=-1, keepdims=True)
    labels = jax.random.randint(k2, (bsz,), 0, 4, dtype=jnp.int32)

    # supervised path, multi-tile grid (tile_n=8 -> 2 parallel tiles over N=16 anchors)
    loss_sup = supcon_loss(feats, labels, tile_n=8)
    jax.block_until_ready(loss_sup)
    ref_sup = supcon_loss_ref(feats, labels)
    assert jnp.allclose(loss_sup, ref_sup, rtol=1e-4, atol=1e-4), (loss_sup, ref_sup)

    # unsupervised (SimCLR) path, auto tile size
    loss_unsup = supcon_loss(feats)
    jax.block_until_ready(loss_unsup)
    ref_unsup = supcon_loss_ref(feats)
    assert jnp.allclose(loss_unsup, ref_unsup, rtol=1e-4, atol=1e-4), (loss_unsup, ref_unsup)

    print("KERNEL_OK")
</pallas_src>

<mosaic_0001>
module attributes {stable_mosaic.version = 11 : i64} {
  func.func @_supcon_kernel(%arg0: i32, %arg1: memref<8x32xf32, #tpu.memory_space<vmem>>, %arg2: memref<16x32xf32, #tpu.memory_space<vmem>>, %arg3: memref<8x1xi32, #tpu.memory_space<vmem>>, %arg4: memref<1x16xi32, #tpu.memory_space<vmem>>, %arg5: memref<8x1xf32, #tpu.memory_space<vmem>>) attributes {dimension_semantics = [#tpu.dimension_semantics<parallel>], iteration_bounds = array<i64: 2>, scalar_prefetch = 0 : i64, scratch_operands = 0 : i64, tpu.core_type = #tpu.core_type<tc>, window_params = [{transform_indices = @transform_0, window_bounds = array<i64: 8, 32>}, {pipeline_mode = #tpu.pipeline_mode<synchronous>, transform_indices = @transform_1, window_bounds = array<i64: 16, 32>}, {transform_indices = @transform_2, window_bounds = array<i64: 8, 1>}, {pipeline_mode = #tpu.pipeline_mode<synchronous>, transform_indices = @transform_3, window_bounds = array<i64: 1, 16>}, {transform_indices = @transform_4, window_bounds = array<i64: 8, 1>}]} {
    %c0 = arith.constant 0 : index
    %c0_0 = arith.constant 0 : index
    %0 = vector.load %arg1[%c0, %c0_0] : memref<8x32xf32, #tpu.memory_space<vmem>>, vector<8x32xf32>
    %c0_1 = arith.constant 0 : index
    %c0_2 = arith.constant 0 : index
    %1 = vector.load %arg2[%c0_1, %c0_2] : memref<16x32xf32, #tpu.memory_space<vmem>>, vector<16x32xf32>
    %cst = arith.constant dense<0.000000e+00> : vector<8x16xf32>
    %2 = tpu.matmul %0, %1, %cst {dimension_numbers = #tpu.dot_dimension_numbers<[1], [1], [0], [0], [0, 0, 1, 0], [], []>} : vector<8x32xf32>, vector<16x32xf32>, vector<8x16xf32> -> vector<8x16xf32>
    %cst_3 = arith.constant 14.2857141 : f32
    %3 = vector.broadcast %cst_3 : f32 to vector<8x16xf32>
    %4 = arith.mulf %2, %3 : vector<8x16xf32>
    %cst_4 = arith.constant dense<0xFF800000> : vector<8xf32>
    %5 = vector.multi_reduction <maximumf>, %4, %cst_4 [1] : vector<8x16xf32> to vector<8xf32>
    %6 = vector.shape_cast %5 : vector<8xf32> to vector<8x1xf32>
    %7 = vector.broadcast %6 : vector<8x1xf32> to vector<8x16xf32>
    %8 = arith.subf %4, %7 : vector<8x16xf32>
    %9 = tpu.iota {dimensions = array<i32: 0>} : vector<8x16xi32>
    %c8_i32 = arith.constant 8 : i32
    %10 = arith.muli %arg0, %c8_i32 : i32
    %11 = vector.broadcast %10 : i32 to vector<8x16xi32>
    %12 = arith.addi %9, %11 : vector<8x16xi32>
    %13 = tpu.iota {dimensions = array<i32: 1>} : vector<8x16xi32>
    %14 = arith.cmpi ne, %12, %13 : vector<8x16xi32>
    %15 = arith.extui %14 : vector<8x16xi1> to vector<8x16xi32>
    %16 = arith.sitofp %15 : vector<8x16xi32> to vector<8x16xf32>
    %c0_5 = arith.constant 0 : index
    %c0_6 = arith.constant 0 : index
    %17 = vector.load %arg3[%c0_5, %c0_6] : memref<8x1xi32, #tpu.memory_space<vmem>>, vector<8x1xi32>
    %c0_7 = arith.constant 0 : index
    %c0_8 = arith.constant 0 : index
    %18 = vector.load %arg4[%c0_7, %c0_8] : memref<1x16xi32, #tpu.memory_space<vmem>>, vector<1x16xi32>
    %19 = vector.broadcast %17 : vector<8x1xi32> to vector<8x16xi32>
    %20 = vector.broadcast %18 : vector<1x16xi32> to vector<8x16xi32>
    %21 = arith.cmpi eq, %19, %20 : vector<8x16xi32>
    %22 = arith.extui %21 : vector<8x16xi1> to vector<8x16xi32>
    %23 = arith.sitofp %22 : vector<8x16xi32> to vector<8x16xf32>
    %24 = arith.mulf %23, %16 : vector<8x16xf32>
    %25 = math.exp %8 : vector<8x16xf32>
    %26 = arith.mulf %25, %16 : vector<8x16xf32>
    %cst_9 = arith.constant dense<0.000000e+00> : vector<8xf32>
    %27 = vector.multi_reduction <add>, %26, %cst_9 [1] : vector<8x16xf32> to vector<8xf32>
    %28 = vector.shape_cast %27 : vector<8xf32> to vector<8x1xf32>
    %29 = math.log %28 : vector<8x1xf32>
    %cst_10 = arith.constant dense<0.000000e+00> : vector<8xf32>
    %30 = vector.multi_reduction <add>, %24, %cst_10 [1] : vector<8x16xf32> to vector<8xf32>
    %31 = vector.shape_cast %30 : vector<8xf32> to vector<8x1xf32>
    %32 = arith.mulf %24, %8 : vector<8x16xf32>
    %cst_11 = arith.constant dense<0.000000e+00> : vector<8xf32>
    %33 = vector.multi_reduction <add>, %32, %cst_11 [1] : vector<8x16xf32> to vector<8xf32>
    %34 = vector.shape_cast %33 : vector<8xf32> to vector<8x1xf32>
    %cst_12 = arith.constant 9.99999997E-7 : f32
    %35 = vector.broadcast %cst_12 : f32 to vector<8x1xf32>
    %36 = arith.cmpf olt, %31, %35 : vector<8x1xf32>
    %cst_13 = arith.constant 1.000000e+00 : f32
    %37 = vector.broadcast %cst_13 : f32 to vector<8x1xf32>
    %38 = arith.select %36, %37, %31 : vector<8x1xi1>, vector<8x1xf32>
    %39 = arith.mulf %31, %29 : vector<8x1xf32>
    %40 = arith.subf %34, %39 : vector<8x1xf32>
    %41 = arith.divf %40, %38 : vector<8x1xf32>
    %cst_14 = arith.constant -1.000000e+00 : f32
    %42 = vector.broadcast %cst_14 : f32 to vector<8x1xf32>
    %43 = arith.mulf %42, %41 : vector<8x1xf32>
    %c0_15 = arith.constant 0 : index
    %c0_16 = arith.constant 0 : index
    %44 = vector.load %arg5[%c0_15, %c0_16] : memref<8x1xf32, #tpu.memory_space<vmem>>, vector<8x1xf32>
    tpu.vector_store %arg5[%c0_15, %c0_16], %43 {strides = array<i32>} : memref<8x1xf32, #tpu.memory_space<vmem>>, vector<8x1xf32>,
    return
  }
  func.func @transform_0(%arg0: i32) -> (i32, i32) {
    %c0_i32 = arith.constant 0 : i32
    %c0_i32_0 = arith.constant 0 : i32
    return %arg0, %c0_i32 : i32, i32
  }
  func.func @transform_1(%arg0: i32) -> (i32, i32) {
    %c0_i32 = arith.constant 0 : i32
    %c0_i32_0 = arith.constant 0 : i32
    %c0_i32_1 = arith.constant 0 : i32
    return %c0_i32, %c0_i32_0 : i32, i32
  }
  func.func @transform_2(%arg0: i32) -> (i32, i32) {
    %c0_i32 = arith.constant 0 : i32
    %c0_i32_0 = arith.constant 0 : i32
    return %arg0, %c0_i32 : i32, i32
  }
  func.func @transform_3(%arg0: i32) -> (i32, i32) {
    %c0_i32 = arith.constant 0 : i32
    %c0_i32_0 = arith.constant 0 : i32
    %c0_i32_1 = arith.constant 0 : i32
    return %c0_i32, %c0_i32_0 : i32, i32
  }
  func.func @transform_4(%arg0: i32) -> (i32, i32) {
    %c0_i32 = arith.constant 0 : i32
    %c0_i32_0 = arith.constant 0 : i32
    return %arg0, %c0_i32 : i32, i32
  }
}

</mosaic_0001>

<llo_original>
// kernel: tpu_custom_call.1
$region0: #{tpu_custom_call.1}
  #allocation0 [shape = 'u32[]', space=smem, size = 0x4, offset = 0x4, fixed_abs, tag = 'smem constant byte address 0x4 - core index']
  #allocation1 [shape = 'u32[72,128]{1,0:T(1,128)}', space=vmem, size = 0x9000, scoped, tag = 'internal scratch']
  %s0 = inlined_call_operand.vmem [shape: f32[16,32], index: 0, kind: input, shape index: {}]
  %s1 = inlined_call_operand.hbm [shape: f32[16,32], index: 1, kind: input, shape index: {}]
  %s2 = inlined_call_operand.vmem [shape: s32[16,1], index: 2, kind: input, shape index: {}]
  %s3 = inlined_call_operand.vmem [shape: s32[1,16], index: 3, kind: input, shape index: {}]
  %s4 = inlined_call_operand.vmem [shape: f32[16,1], index: 4, kind: output, shape index: {}]
  %s5 = sld [smem:[#allocation0]]
  $region53: #{tpu_custom_call.1} parent=0
    _
  %s7 = ssub.s32 1, %s5
  %s8 = scalar_select 0, %s7, %s5
  $region1: #{tpu_custom_call.1} parent=0
    #allocation2 [shape = 'u8[8192]{0}', space=vmem, size = 0x2000, scoped, tag = 'input window, operand 1, single buffered']
    #allocation3 [shape = 's32[2]{0}', space=sflag, size = 0x8, scoped, tag = 'scoped memory for tpu_custom_call.1']
    %9 = vsyncpa [#allocation3], 0
    loop: start=0, step=1, limit=4
    $region2: #{tpu_custom_call.1} parent=1 // loop_pre_header
      _
    $region3: #{tpu_custom_call.1} parent=1 // loop_header
      %s11 = sphi 0, %s15
      %p12 = scmp.ge.s32.totalorder %s11, 4
      %s21 = sphi 0, %s23
      %s24 = sphi 0, %s21
      %s25 = sphi 0, %s24
      %s41 = sphi 0, %s25
      %s45 = sphi 0, %s45
      %s47 = sphi 0, %s45
      %s48 = sphi 0, %s47
      %s62 = sphi 0, %s48
      %s68 = sphi 0, %s70
      %s71 = sphi 0, %s68
      %s72 = sphi 0, %s71
      %s88 = sphi 0, %s72
      %s92 = sphi 0, %s92
      %s94 = sphi 0, %s92
      %s95 = sphi 0, %s94
      %s109 = sphi 0, %s95
      %s115 = sphi 0, %s117
      %s118 = sphi 0, %s115
      %s119 = sphi 0, %s118
      %s135 = sphi 0, %s119
    $region4: #{tpu_custom_call.1} parent=1 // loop_header_branch
      %14 = sbr.rel (%p12) target = $region8
    $region5: #{tpu_custom_call.1} parent=1 // loop_body
      %s16 = ssub.s32 %s11, 1
      %s17 = ssub.s32 %s11, 2
      %s18 = sadd.s32 %s11, 1
      %s19 = ssub.s32 %s11, %s18
      %p20 = scmp.eq.s32.totalorder %s19, 0
      %s22 = sadd.s32 %s21, 1
      %s23 = scalar_select %p20, %s21, %s22
      %p26 = pneg %p20
      %p27 = scmp.eq.s32.totalorder %s11, 1
      %p28 = por %p26, %p27
      %p29 = scmp.ne.s32.totalorder %s21, %s24
      %p30 = scmp.eq.s32.totalorder %s11, 0
      %p31 = por %p29, %p30
      %p32 = scmp.ne.s32.totalorder %s21, %s24
      %p33 = scmp.eq.s32.totalorder %s16, 1
      %p34 = por %p32, %p33
      %p35 = scmp.ne.s32.totalorder %s24, %s25
      %p36 = scmp.eq.s32.totalorder %s16, 0
      %p37 = por %p35, %p36
      %p38 = scmp.ne.s32.totalorder %s24, %s25
      %p39 = scmp.eq.s32.totalorder %s17, 1
      %p40 = por %p38, %p39
      %p42 = scmp.ne.s32.totalorder %s25, %s41
      %p43 = scmp.eq.s32.totalorder %s17, 0
      %p44 = por %p42, %p43
      %s46 = sadd.s32 %s45, 1
      %p49 = scmp.eq.s32.totalorder %s11, 1
      %p50 = scmp.ne.s32.totalorder %s45, %s47
      %p51 = scmp.eq.s32.totalorder %s11, 0
      %p52 = por %p50, %p51
      %p53 = scmp.ne.s32.totalorder %s45, %s47
      %p54 = scmp.eq.s32.totalorder %s16, 1
      %p55 = por %p53, %p54
      %p56 = scmp.ne.s32.totalorder %s47, %s48
      %p57 = scmp.eq.s32.totalorder %s16, 0
      %p58 = por %p56, %p57
      %p59 = scmp.ne.s32.totalorder %s47, %s48
      %p60 = scmp.eq.s32.totalorder %s17, 1
      %p61 = por %p59, %p60
      %p63 = scmp.ne.s32.totalorder %s48, %s62
      %p64 = scmp.eq.s32.totalorder %s17, 0
      %p65 = por %p63, %p64
      %s66 = ssub.s32 %s11, %s18
      %p67 = scmp.eq.s32.totalorder %s66, 0
      %s69 = sadd.s32 %s68, 1
      %s70 = scalar_select %p67, %s68, %s69
      %p73 = pneg %p67
      %p74 = scmp.eq.s32.totalorder %s11, 1
      %p75 = por %p73, %p74
      %p76 = scmp.ne.s32.totalorder %s68, %s71
      %p77 = scmp.eq.s32.totalorder %s11, 0
      %p78 = por %p76, %p77
      %p79 = scmp.ne.s32.totalorder %s68, %s71
      %p80 = scmp.eq.s32.totalorder %s16, 1
      %p81 = por %p79, %p80
      %p82 = scmp.ne.s32.totalorder %s71, %s72
      %p83 = scmp.eq.s32.totalorder %s16, 0
      %p84 = por %p82, %p83
      %p85 = scmp.ne.s32.totalorder %s71, %s72
      %p86 = scmp.eq.s32.totalorder %s17, 1
      %p87 = por %p85, %p86
      %p89 = scmp.ne.s32.totalorder %s72, %s88
      %p90 = scmp.eq.s32.totalorder %s17, 0
      %p91 = por %p89, %p90
      %s93 = sadd.s32 %s92, 1
      %p96 = scmp.eq.s32.totalorder %s11, 1
      %p97 = scmp.ne.s32.totalorder %s92, %s94
      %p98 = scmp.eq.s32.totalorder %s11, 0
      %p99 = por %p97, %p98
      %p100 = scmp.ne.s32.totalorder %s92, %s94
      %p101 = scmp.eq.s32.totalorder %s16, 1
      %p102 = por %p100, %p101
      %p103 = scmp.ne.s32.totalorder %s94, %s95
      %p104 = scmp.eq.s32.totalorder %s16, 0
      %p105 = por %p103, %p104
      %p106 = scmp.ne.s32.totalorder %s94, %s95
      %p107 = scmp.eq.s32.totalorder %s17, 1
      %p108 = por %p106, %p107
      %p110 = scmp.ne.s32.totalorder %s95, %s109
      %p111 = scmp.eq.s32.totalorder %s17, 0
      %p112 = por %p110, %p111
      %s113 = ssub.s32 %s11, %s18
      %p114 = scmp.eq.s32.totalorder %s113, 0
      %s116 = sadd.s32 %s115, 1
      %s117 = scalar_select %p114, %s115, %s116
      %p120 = pneg %p114
      %p121 = scmp.eq.s32.totalorder %s11, 1
      %p122 = por %p120, %p121
      %p123 = scmp.ne.s32.totalorder %s115, %s118
      %p124 = scmp.eq.s32.totalorder %s11, 0
      %p125 = por %p123, %p124
      %p126 = scmp.ne.s32.totalorder %s115, %s118
      %p127 = scmp.eq.s32.totalorder %s16, 1
      %p128 = por %p126, %p127
      %p129 = scmp.ne.s32.totalorder %s118, %s119
      %p130 = scmp.eq.s32.totalorder %s16, 0
      %p131 = por %p129, %p130
      %p132 = scmp.ne.s32.totalorder %s118, %s119
      %p133 = scmp.eq.s32.totalorder %s17, 1
      %p134 = por %p132, %p133
      %p136 = scmp.ne.s32.totalorder %s119, %s135
      %p137 = scmp.eq.s32.totalorder %s17, 0
      %p138 = por %p136, %p137
      %p139 = scmp.le.s32.totalorder 1, %s11
      %p140 = scmp.lt.s32.totalorder %s11, 3
      %p141 = pnand %p139, %p140
      %p142 = pneg %p141
      // Predicated region
      $region9: #{tpu_custom_call.1} parent=5 // pred_check
        _
      $region10: #{tpu_custom_call.1} parent=5 // pred_check_branch
        %144 = sbr.rel (%p141) target = $region12
      $region11: #{tpu_custom_call.1} parent=5 // pred_region
        %s145 = ssub.s32 %s11, 1
        // Predicated region
        $region13: #{tpu_custom_call.1} parent=11 // pred_check
          %p146 = pneg %p58
        $region14: #{tpu_custom_call.1} parent=11 // pred_check_branch
          %148 = sbr.rel (%p146) target = $region16
        $region15: #{tpu_custom_call.1} parent=11 // pred_region
          %150 = vsyncadd [#allocation3], 0
          %s151 = sshll.u32 %s1, 4
          %s152 = int_to_ptr.hbm [resolvable:$true] %s151
          %s153 = sshll.u32 [#allocation2], 4
          %s154 = int_to_ptr.vmem [resolvable:$true] %s153
          %159 = dma.hbm_to_vmem [thread:$0]  %s152, 256, %s154, [#allocation3], 128, 128, 8
        $region16: #{tpu_custom_call.1} parent=11 // pred_fallthru
          _
        // Predicated region
        $region17: #{tpu_custom_call.1} parent=11 // pred_check
          %p160 = pneg %p105
        $region18: #{tpu_custom_call.1} parent=11 // pred_check_branch
          %162 = sbr.rel (%p160) target = $region20
        $region19: #{tpu_custom_call.1} parent=11 // pred_region
          _
        $region20: #{tpu_custom_call.1} parent=11 // pred_fallthru
          _
      $region12: #{tpu_custom_call.1} parent=5 // pred_fallthru
        _
      %p163 = scmp.lt.s32.totalorder %s11, 2
      // Predicated region
      $region21: #{tpu_custom_call.1} parent=5 // pred_check
        %p164 = pneg %p163
      $region22: #{tpu_custom_call.1} parent=5 // pred_check_branch
        %166 = sbr.rel (%p164) target = $region24
      $region23: #{tpu_custom_call.1} parent=5 // pred_region
        // Predicated region
        $region25: #{tpu_custom_call.1} parent=23 // pred_check
          %p167 = pneg %p31
        $region26: #{tpu_custom_call.1} parent=23 // pred_check_branch
          %169 = sbr.rel (%p167) target = $region28
        $region27: #{tpu_custom_call.1} parent=23 // pred_region
          %p170 = scmp.lt.s32.totalorder %s11, 1
          %s171 = scalar_select %p170, %s11, 1
          %s172 = smul.addr %s171, 8
          %s173 = scalar_lea.vmem %s0, %s172
        $region28: #{tpu_custom_call.1} parent=23 // pred_fallthru
          _
        // Predicated region
        $region29: #{tpu_custom_call.1} parent=23 // pred_check
          %p174 = pneg %p78
        $region30: #{tpu_custom_call.1} parent=23 // pred_check_branch
          %176 = sbr.rel (%p174) target = $region32
        $region31: #{tpu_custom_call.1} parent=23 // pred_region
          %p177 = scmp.lt.s32.totalorder %s11, 1
          %s178 = scalar_select %p177, %s11, 1
          %s179 = smul.addr %s178, 8
          %s180 = scalar_lea.vmem %s2, %s179
        $region32: #{tpu_custom_call.1} parent=23 // pred_fallthru
          _
      $region24: #{tpu_custom_call.1} parent=5 // pred_fallthru
        _
      %p181 = scmp.le.s32.totalorder 1, %s11
      %p182 = scmp.lt.s32.totalorder %s11, 3
      %p183 = pnand %p181, %p182
      %p184 = pneg %p183
      // Predicated region
      $region33: #{tpu_custom_call.1} parent=5 // pred_check
        _
      $region34: #{tpu_custom_call.1} parent=5 // pred_check_branch
        %186 = sbr.rel (%p183) target = $region36
      $region35: #{tpu_custom_call.1} parent=5 // pred_region
        %s187 = ssub.s32 %s11, 1
        // Predicated region
        $region37: #{tpu_custom_call.1} parent=35 // pred_check
          %p188 = pneg %p58
        $region38: #{tpu_custom_call.1} parent=35 // pred_check_branch
          %190 = sbr.rel (%p188) target = $region40
        $region39: #{tpu_custom_call.1} parent=35 // pred_region
          %192 = dma.done [#allocation3], 256
        $region40: #{tpu_custom_call.1} parent=35 // pred_fallthru
          _
        %p193 = scmp.lt.s32.totalorder %s16, 1
        %s194 = scalar_select %p193, %s16, 1
        %s195 = smul.addr %s194, 8
        %s196 = scalar_lea.vmem %s0, %s195
        %p197 = pneg %p37
        %p198 = pneg %p34
        %p199 = pneg %p58
        %p200 = pneg %p55
        %p201 = scmp.lt.s32.totalorder %s16, 1
        %s202 = scalar_select %p201, %s16, 1
        %s203 = smul.addr %s202, 8
        %s204 = scalar_lea.vmem %s2, %s203
        %p205 = pneg %p84
        %p206 = pneg %p81
        %p207 = pneg %p105
        %p208 = pneg %p102
        %p209 = pneg %p131
        %p210 = pneg %p128
        %p211 = scmp.lt.s32.totalorder %s16, 1
        %s212 = scalar_select %p211, %s16, 1
        %s213 = smul.addr %s212, 8
        %s214 = scalar_lea.vmem %s4, %s213
        %p215 = scmp.lt.s32.totalorder %s16, 1
        %s216 = scalar_select %p215, %s16, 1
        %s217 = smul.addr %s216, 8
        %s218 = scalar_lea.vmem %s0, %s217
        %p219 = scmp.lt.s32.totalorder %s16, 1
        %s220 = scalar_select %p219, %s16, 1
        %s221 = smul.addr %s220, 8
        %s222 = scalar_lea.vmem %s2, %s221
        %p223 = scmp.lt.s32.totalorder %s16, 1
        %s224 = scalar_select %p223, %s16, 1
        %s225 = smul.addr %s224, 8
        %s226 = scalar_lea.vmem %s4, %s225
        %v227 = vld [vmem:[%s218] sm:$0xff]
        %v228 = vld [vmem:[#allocation2] sm:$0xff]
        %v229 = vld [vmem:[#allocation2 + $0x8] sm:$0xff]
        %vm230 = vcmask 261120
        %v232 = vsel %vm230, %v227, 0
        %v235 = vsel %vm230, %v228, 0
        %v238 = vsel %vm230, %v229, 0
        %240 = vmatpush.xpose.msra.mxu0 0.0
        %241 = vmatpush.xpose.msra.mxu0 0.0
        %242 = vmatpush.xpose.msra.mxu0 0.0
        %243 = vmatpush.xpose.msra.mxu0 0.0
        %244 = vmatpush.xpose.msra.mxu0 0.0
        %245 = vmatpush.xpose.msra.mxu0 0.0
        %246 = vmatpush.xpose.msra.mxu0 0.0
        %247 = vmatpush.xpose.msra.mxu0 0.0
        %248 = vmatpush.xpose.msra.mxu0 0.0
        %249 = vmatpush.xpose.msra.mxu0 0.0
        %250 = vmatpush.xpose.msra.mxu0 0.0
        %251 = vmatpush.xpose.msra.mxu0 0.0
        %252 = vmatpush.xpose.msra.mxu0 0.0
        %253 = vmatpush.xpose.msra.mxu0 0.0
        %254 = vmatpush.xpose.msra.mxu0 %v238
        %255 = vmatpush.xpose.msra.mxu0 %v235
        %256 = vmatmul.f32.gmra.mxu0 %v232
        %v257 = vpop.f32.mrf.mxu0
        %v258 = vadd.f32 0.0, %v257
        %259 = vdwg.mxu0
        %v260 = vmul.f32 %v258, 14.285714
        %vm261 = vcmask 130048
        %v262 = vsel %vm261, %v260, -inf
        %263 = vmax.xlane.f32.xlu0 %v262
        %v264 = vpop.xlane.xlu0 %263
        %v265 = vsub.f32 %v260, %v264
        %v266 = vlaneseq
        %v267 = vshrl.u32 %v266, 7
        %s268 = smul.u32 %s16, 8
        %v269 = vstv %s268
        %v270 = vadd.s32 %v267, %v269
        %v271 = vlaneseq
        %v272 = vand.u32 %v271, 127
        %vm273 = vcmp.ne.s32.totalorder %v270, %v272
        %v274 = vsel %vm273, 1, 0
        %v275 = vcvt.s32.f32 %v274
        %v276 = vld [vmem:[%s222] sm:$0xff]
        %v277 = vld [vmem:[%s3] sm:$0x1]
        %278 = vset.pattern.permute.xlu0 0
        %279 = vperm.xlu0 %278, %v276
        %v280 = vpop.permute.xlu0 %279
        %v281 = vperm.slane %v277, 0
        %vm282 = vcmp.eq.s32.totalorder %v280, %v281
        %v283 = vsel %vm282, 1, 0
        %v284 = vcvt.s32.f32 %v283
        %v285 = vmul.f32 %v284, %v275
        %v286 = vmul.f32 %v265, 1.442695
        %v287 = vpow.pop %v286
        %v288 = vmul.f32 %v287, %v275
        %v289 = vsel %vm261, %v288, 0.0
        %290 = vadd.xlane.f32.xlu0 %v289
        %v291 = vpop.xlane.xlu0 %290
        %v292 = vlog2.pop %v291
        %v293 = vmul.f32 %v292, 0.6931472
        %v294 = vsel %vm261, %v285, 0.0
        %295 = vadd.xlane.f32.xlu0 %v294
        %v296 = vpop.xlane.xlu0 %295
        %v297 = vmul.f32 %v285, %v265
        %v298 = vsel %vm261, %v297, 0.0
        %299 = vadd.xlane.f32.xlu0 %v298
        %v300 = vpop.xlane.xlu0 %299
        %vm301 = vcmp.lt.f32.partialorder %v296, 1e-06
        %v302 = vsel %vm301, 1.0, %v296
        %v303 = vmul.f32 %v296, %v293
        %v304 = vsub.f32 %v300, %v303
        %v305 = vrcp.pop %v302
        %v306 = vmul.f32 %v302, %v305
        %v307 = vsub.f32 1.0, %v306
        %v308 = vmul.f32 %v305, %v307
        %v309 = vadd.f32 %v305, %v308
        %vm310 = vweird.f32 %v302
        %vm311 = vweird.f32 %v305
        %vm312 = vmor %vm310, %vm311
        %v313 = vsel %vm312, %v305, %v309
        %v314 = vand.u32 2147483647, %v302
        %vm315 = vcmp.eq.f32.partialorder %v314, 8.507059e+37
        %v316 = vand.u32 %v302, 2147483648
        %v317 = vor.u32 1.1754944e-38, %v316
        %v318 = vsel %vm315, %v317, %v313
        %v319 = vmul.f32 %v304, %v318
        %v320 = vmul.f32 %v319, -1.0
        %vm321 = vcmask 7168
        %322 = vst.msk [vmem:[%s226] sm:$0xff] %vm321, %v320
        %p323 = scmp.lt.s32.totalorder %s16, 1
        %s324 = scalar_select %p323, %s16, 1
        %s325 = smul.addr %s324, 8
        %s326 = scalar_lea.vmem %s4, %s325
        // Predicated region
        $region41: #{tpu_custom_call.1} parent=35 // pred_check
          %p327 = pneg %p128
        $region42: #{tpu_custom_call.1} parent=35 // pred_check_branch
          %329 = sbr.rel (%p327) target = $region44
        $region43: #{tpu_custom_call.1} parent=35 // pred_region
          _
        $region44: #{tpu_custom_call.1} parent=35 // pred_fallthru
          _
      $region36: #{tpu_custom_call.1} parent=5 // pred_fallthru
        _
      %p330 = scmp.le.s32.totalorder 2, %s11
      // Predicated region
      $region45: #{tpu_custom_call.1} parent=5 // pred_check
        %p331 = pneg %p330
      $region46: #{tpu_custom_call.1} parent=5 // pred_check_branch
        %333 = sbr.rel (%p331) target = $region48
      $region47: #{tpu_custom_call.1} parent=5 // pred_region
        %s334 = ssub.s32 %s11, 2
        // Predicated region
        $region49: #{tpu_custom_call.1} parent=47 // pred_check
          %p335 = pneg %p134
        $region50: #{tpu_custom_call.1} parent=47 // pred_check_branch
          %337 = sbr.rel (%p335) target = $region52
        $region51: #{tpu_custom_call.1} parent=47 // pred_region
          %p338 = scmp.lt.s32.totalorder %s17, 1
          %s339 = scalar_select %p338, %s17, 1
          %s340 = smul.addr %s339, 8
          %s341 = scalar_lea.vmem %s4, %s340
        $region52: #{tpu_custom_call.1} parent=47 // pred_fallthru
          _
      $region48: #{tpu_custom_call.1} parent=5 // pred_fallthru
        _
    $region6: #{tpu_custom_call.1} parent=1 // loop_footer
      %s15 = sadd.s32 1, %s11
    $region7: #{tpu_custom_call.1} parent=1 // loop_footer_branch
      %10 = sbr.rel target = $region3
    $region8: #{tpu_custom_call.1} parent=1 // loop_exit
      _
    %342 = vsyncpa [#allocation3], 1
    %s343 = scalar_lea.sflag [#allocation3], 1
    %344 = vsyncpa %s343, 1

</llo_original>
